<compile_context>
chip_gen: v7x
topology: tpu7x:2x2x1
jax: 0.10.0
libtpu: 0.0.40
codegen_flags: <defaults>
</compile_context>

<pallas_src>
import functools

import jax
import jax.numpy as jnp
from jax.experimental import pallas as pl
from jax.experimental.pallas import tpu as pltpu


# ---------------------------------------------------------------------------
# Kernels (single invocation, full arrays resident in VMEM)
# ---------------------------------------------------------------------------

def _masked_reduce_kernel(p_ref, t_ref, m_ref, o_ref, *, mean):
    """o = sum((p - t)^2 * mask)           (sum)
       o = sum((p - t)^2 * mask) / max(sum(mask), 1)   (mean, fused in-kernel)."""
    diff = p_ref[...] - t_ref[...]
    m_f32 = m_ref[...].astype(jnp.float32)          # int8 -> f32 on the VPU
    sse = jnp.sum(diff * diff * m_f32)
    if mean:
        cnt = jnp.sum(m_ref[...].astype(jnp.int32)).astype(jnp.float32)
        o_ref[0, 0] = sse / jnp.maximum(cnt, 1.0)
    else:
        o_ref[0, 0] = sse


def _reduce_kernel(p_ref, t_ref, o_ref, *, scale):
    """o = sum((p - t)^2) * scale   (scale = 1.0 for 'sum', 1/N for 'mean')."""
    diff = p_ref[...] - t_ref[...]
    o_ref[0, 0] = jnp.sum(diff * diff) * scale


def _sq_err_kernel(p_ref, t_ref, o_ref):
    """Elementwise squared error (reduction='none', no mask)."""
    diff = p_ref[...] - t_ref[...]
    o_ref[...] = diff * diff


def _masked_sq_err_kernel(p_ref, t_ref, m_ref, o_ref):
    """Elementwise squared error with the mask multiply fused in."""
    diff = p_ref[...] - t_ref[...]
    o_ref[...] = diff * diff * m_ref[...].astype(jnp.float32)


# ---------------------------------------------------------------------------
# Wrappers
# ---------------------------------------------------------------------------

_SMEM_SCALAR = pl.BlockSpec(memory_space=pltpu.SMEM)


def _masked_reduce(predictions, targets, mask_i8, mean):
    out = pl.pallas_call(
        functools.partial(_masked_reduce_kernel, mean=mean),
        out_shape=jax.ShapeDtypeStruct((1, 1), jnp.float32),
        out_specs=_SMEM_SCALAR,
    )(predictions, targets, mask_i8)
    return out[0, 0]


def _reduce(predictions, targets, mean):
    scale = 1.0 / float(predictions.size) if mean else 1.0   # static constant
    out = pl.pallas_call(
        functools.partial(_reduce_kernel, scale=scale),
        out_shape=jax.ShapeDtypeStruct((1, 1), jnp.float32),
        out_specs=_SMEM_SCALAR,
    )(predictions, targets)
    return out[0, 0]


def _sq_err(predictions, targets):
    return pl.pallas_call(
        _sq_err_kernel,
        out_shape=jax.ShapeDtypeStruct(predictions.shape, jnp.float32),
    )(predictions, targets)


def _masked_sq_err(predictions, targets, mask_i8):
    return pl.pallas_call(
        _masked_sq_err_kernel,
        out_shape=jax.ShapeDtypeStruct(predictions.shape, jnp.float32),
    )(predictions, targets, mask_i8)


class PixelwiseLoss:
    """JAX/Pallas equivalent of the PyTorch PixelwiseLoss module."""

    def __init__(self, reduction="mean"):
        self.reduction = reduction

    def __call__(self, predictions, targets, mask=None):
        predictions = jnp.asarray(predictions, jnp.float32)
        targets = jnp.asarray(targets, jnp.float32)

        if mask is not None:
            # Match PyTorch: any non-bool mask is treated as boolean.
            # Ship it as int8 (1 byte/elem) and cast to f32 inside the kernel.
            mask_i8 = jnp.asarray(mask).astype(jnp.bool_).astype(jnp.int8)
            if self.reduction in ("mean", "sum"):
                return _masked_reduce(predictions, targets, mask_i8,
                                      mean=(self.reduction == "mean"))
            # TODO(synk): PyTorch returns a dynamically-shaped 1-D tensor
            # (pixel_errors[mask]); dynamic shapes have no JAX/Pallas
            # equivalent, so we return dense squared errors zeroed at invalid
            # pixels instead (mask multiply is fused into the kernel).
            return _masked_sq_err(predictions, targets, mask_i8)

        # no mask
        if self.reduction in ("mean", "sum"):
            return _reduce(predictions, targets,
                           mean=(self.reduction == "mean"))
        return _sq_err(predictions, targets)


# ---------------------------------------------------------------------------
# Main
# ---------------------------------------------------------------------------

if __name__ == "__main__":
    key = jax.random.PRNGKey(0)
    k1, k2, k3 = jax.random.split(key, 3)

    shape = (1, 128, 128)  # matches the module's documented input shape
    predictions = jax.random.normal(k1, shape, dtype=jnp.float32)
    targets = jax.random.normal(k2, shape, dtype=jnp.float32)
    mask = jax.random.bernoulli(k3, p=0.7, shape=shape)

    loss_mean = PixelwiseLoss("mean")
    loss_sum = PixelwiseLoss("sum")
    loss_none = PixelwiseLoss("none")

    # masked + unmasked paths
    out_mean_masked = loss_mean(predictions, targets, mask)
    out_sum_masked = loss_sum(predictions, targets, mask)
    out_none_masked = loss_none(predictions, targets, mask)
    out_mean = loss_mean(predictions, targets)
    out_sum = loss_sum(predictions, targets)
    out_none = loss_none(predictions, targets)

    jax.block_until_ready((out_mean_masked, out_sum_masked, out_none_masked,
                           out_mean, out_sum, out_none))

    # sanity check against pure-JAX reference
    ref_err = (predictions - targets) ** 2
    ref_mean = ref_err.mean()
    ref_sum = ref_err.sum()
    m = mask.astype(jnp.float32)
    ref_sum_masked = (ref_err * m).sum()
    ref_mean_masked = ref_sum_masked / jnp.maximum(m.sum(), 1.0)

    assert jnp.allclose(out_mean, ref_mean, rtol=1e-5, atol=1e-5)
    assert jnp.allclose(out_sum, ref_sum, rtol=1e-5, atol=1e-4)
    assert jnp.allclose(out_mean_masked, ref_mean_masked, rtol=1e-5, atol=1e-5)
    assert jnp.allclose(out_sum_masked, ref_sum_masked, rtol=1e-5, atol=1e-4)
    assert jnp.allclose(out_none, ref_err, rtol=1e-5, atol=1e-5)
    assert jnp.allclose(out_none_masked, ref_err * m, rtol=1e-5, atol=1e-5)

    print("KERNEL_OK")
</pallas_src>

<mosaic_0001>
module attributes {stable_mosaic.version = 11 : i64} {
  func.func @_masked_reduce_kernel(%arg0: memref<1x128x128xf32, #tpu.memory_space<vmem>>, %arg1: memref<1x128x128xf32, #tpu.memory_space<vmem>>, %arg2: memref<1x128x128xi8, #tpu.memory_space<vmem>>, %arg3: memref<1x1xf32, #tpu.memory_space<smem>>) attributes {dimension_semantics = [], scalar_prefetch = 0 : i64, scratch_operands = 0 : i64, tpu.core_type = #tpu.core_type<tc>} {
    %c0 = arith.constant 0 : index
    %c0_0 = arith.constant 0 : index
    %c0_1 = arith.constant 0 : index
    %0 = vector.load %arg0[%c0, %c0_0, %c0_1] : memref<1x128x128xf32, #tpu.memory_space<vmem>>, vector<1x128x128xf32>
    %c0_2 = arith.constant 0 : index
    %c0_3 = arith.constant 0 : index
    %c0_4 = arith.constant 0 : index
    %1 = vector.load %arg1[%c0_2, %c0_3, %c0_4] : memref<1x128x128xf32, #tpu.memory_space<vmem>>, vector<1x128x128xf32>
    %2 = arith.subf %0, %1 : vector<1x128x128xf32>
    %c0_5 = arith.constant 0 : index
    %c0_6 = arith.constant 0 : index
    %c0_7 = arith.constant 0 : index
    %3 = vector.load %arg2[%c0_5, %c0_6, %c0_7] : memref<1x128x128xi8, #tpu.memory_space<vmem>>, vector<1x128x128xi8>
    %4 = arith.sitofp %3 : vector<1x128x128xi8> to vector<1x128x128xf32>
    %5 = arith.mulf %2, %2 : vector<1x128x128xf32>
    %6 = arith.mulf %5, %4 : vector<1x128x128xf32>
    %7 = vector.shape_cast %6 : vector<1x128x128xf32> to vector<1x1x128x128xf32>
    %cst = arith.constant dense<0.000000e+00> : vector<1xf32>
    %8 = vector.multi_reduction <add>, %7, %cst [1, 2, 3] : vector<1x1x128x128xf32> to vector<1xf32>
    %9 = vector.shape_cast %8 : vector<1xf32> to vector<1x1x1x1xf32>
    %10 = vector.extract %9[0, 0, 0, 0] : f32 from vector<1x1x1x1xf32>
    %c0_8 = arith.constant 0 : index
    %c0_9 = arith.constant 0 : index
    %c0_10 = arith.constant 0 : index
    %11 = vector.load %arg2[%c0_8, %c0_9, %c0_10] : memref<1x128x128xi8, #tpu.memory_space<vmem>>, vector<1x128x128xi8>
    %12 = arith.extsi %11 : vector<1x128x128xi8> to vector<1x128x128xi32>
    %13 = vector.shape_cast %12 : vector<1x128x128xi32> to vector<1x1x128x128xi32>
    %cst_11 = arith.constant dense<0> : vector<1xi32>
    %14 = vector.multi_reduction <add>, %13, %cst_11 [1, 2, 3] : vector<1x1x128x128xi32> to vector<1xi32>
    %15 = vector.shape_cast %14 : vector<1xi32> to vector<1x1x1x1xi32>
    %16 = vector.extract %15[0, 0, 0, 0] : i32 from vector<1x1x1x1xi32>
    %17 = arith.sitofp %16 : i32 to f32
    %cst_12 = arith.constant 1.000000e+00 : f32
    %18 = arith.maximumf %17, %cst_12 : f32
    %19 = arith.divf %10, %18 : f32
    %c0_13 = arith.constant 0 : index
    %c0_14 = arith.constant 0 : index
    %20 = memref.load %arg3[%c0_13, %c0_14] : memref<1x1xf32, #tpu.memory_space<smem>>
    memref.store %19, %arg3[%c0_13, %c0_14] : memref<1x1xf32, #tpu.memory_space<smem>>
    return
  }
}

</mosaic_0001>

<llo_original>
// kernel: tpu_custom_call.1
$region0: #{tpu_custom_call.1}
  #allocation0 [shape = 'u32[]', space=smem, size = 0x4, offset = 0x4, fixed_abs, tag = 'smem constant byte address 0x4 - core index']
  #allocation1 [shape = 'u32[144,128]{1,0:T(1,128)}', space=vmem, size = 0x12000, scoped, tag = 'internal scratch']
  %s0 = inlined_call_operand.hbm [shape: f32[1,128,128], index: 0, kind: input, shape index: {}]
  %s1 = inlined_call_operand.hbm [shape: f32[1,128,128], index: 1, kind: input, shape index: {}]
  %s2 = inlined_call_operand.hbm [shape: s8[1,128,128], index: 2, kind: input, shape index: {}]
  %s3 = inlined_call_operand.hbm [shape: f32[1,1], index: 3, kind: output, shape index: {}]
  %s4 = sld [smem:[#allocation0]]
  $region34: #{tpu_custom_call.1} parent=0
    _
  %s6 = ssub.s32 1, %s4
  %s7 = scalar_select 0, %s6, %s4
  $region1: #{tpu_custom_call.1} parent=0
    #allocation2 [shape = 'u8[65536]{0}', space=vmem, size = 0x10000, scoped, tag = 'input window, operand 0, single buffered']
    #allocation3 [shape = 's32[1]{0}', space=sflag, size = 0x4, scoped, tag = 'scoped memory for tpu_custom_call.1']
    #allocation4 [shape = 's32[1]{0}', space=sflag, size = 0x4, scoped, tag = 'scoped memory for tpu_custom_call.1']
    #allocation5 [shape = 'u8[65536]{0}', space=vmem, size = 0x10000, scoped, tag = 'input window, operand 1, single buffered']
    #allocation6 [shape = 's32[1]{0}', space=sflag, size = 0x4, scoped, tag = 'scoped memory for tpu_custom_call.1']
    #allocation7 [shape = 'u8[16384]{0}', space=vmem, size = 0x4000, scoped, tag = 'input window, operand 2, single buffered']
    #allocation8 [shape = 'u8[512]{0}', space=smem, size = 0x200, scoped, tag = 'output window, operand 0, single buffered']
    %8 = vsyncpa [#allocation3], 0
    %9 = vsyncpa [#allocation6], 0
    %10 = vsyncpa [#allocation4], 0
    // Predicated region
    $region2: #{tpu_custom_call.1} parent=1 // pred_check
      _
    $region3: #{tpu_custom_call.1} parent=1 // pred_check_branch
      %12 = sbr.rel (0) target = $region5
    $region4: #{tpu_custom_call.1} parent=1 // pred_region
      %s14 = ssub.s32 2048, 2048
      %15 = vsyncadd [#allocation3], %s14
      %s16 = sshll.u32 [#allocation2], 4
      %s17 = int_to_ptr.vmem [resolvable:$true] %s16
      %22 = dma.hbm_to_vmem [thread:$0]  %s0, 2048, %s17, [#allocation3], 128, 128, 8
    $region5: #{tpu_custom_call.1} parent=1 // pred_fallthru
      _
    // Predicated region
    $region6: #{tpu_custom_call.1} parent=1 // pred_check
      _
    $region7: #{tpu_custom_call.1} parent=1 // pred_check_branch
      %24 = sbr.rel (0) target = $region9
    $region8: #{tpu_custom_call.1} parent=1 // pred_region
      %s26 = ssub.s32 2048, 2048
      %27 = vsyncadd [#allocation6], %s26
      %s28 = sshll.u32 [#allocation5], 4
      %s29 = int_to_ptr.vmem [resolvable:$true] %s28
      %34 = dma.hbm_to_vmem [thread:$0]  %s1, 2048, %s29, [#allocation6], 128, 128, 8
    $region9: #{tpu_custom_call.1} parent=1 // pred_fallthru
      _
    // Predicated region
    $region10: #{tpu_custom_call.1} parent=1 // pred_check
      _
    $region11: #{tpu_custom_call.1} parent=1 // pred_check_branch
      %36 = sbr.rel (0) target = $region13
    $region12: #{tpu_custom_call.1} parent=1 // pred_region
      %s38 = ssub.s32 512, 512
      %39 = vsyncadd [#allocation6], %s38
      %s40 = sshll.u32 [#allocation7], 4
      %s41 = int_to_ptr.vmem [resolvable:$true] %s40
      %46 = dma.hbm_to_vmem [thread:$0]  %s2, 512, %s41, [#allocation6], 128, 128, 8
    $region13: #{tpu_custom_call.1} parent=1 // pred_fallthru
      _
    // Predicated region
    $region14: #{tpu_custom_call.1} parent=1 // pred_check
      _
    $region15: #{tpu_custom_call.1} parent=1 // pred_check_branch
      %48 = sbr.rel (0) target = $region17
    $region16: #{tpu_custom_call.1} parent=1 // pred_region
      %49 = dma.done [#allocation3], 2048
    $region17: #{tpu_custom_call.1} parent=1 // pred_fallthru
      _
    // Predicated region
    $region18: #{tpu_custom_call.1} parent=1 // pred_check
      _
    $region19: #{tpu_custom_call.1} parent=1 // pred_check_branch
      %51 = sbr.rel (0) target = $region21
    $region20: #{tpu_custom_call.1} parent=1 // pred_region
      %52 = dma.done [#allocation6], 2048
    $region21: #{tpu_custom_call.1} parent=1 // pred_fallthru
      _
    // Predicated region
    $region22: #{tpu_custom_call.1} parent=1 // pred_check
      _
    $region23: #{tpu_custom_call.1} parent=1 // pred_check_branch
      %54 = sbr.rel (0) target = $region25
    $region24: #{tpu_custom_call.1} parent=1 // pred_region
      %55 = dma.done [#allocation6], 512
    $region25: #{tpu_custom_call.1} parent=1 // pred_fallthru
      _
    %v56 = vld [vmem:[#allocation2] sm:$0xff]
    %v57 = vld [vmem:[#allocation2 + $0x8] sm:$0xff]
    %v58 = vld [vmem:[#allocation2 + $0x10] sm:$0xff]
    %v59 = vld [vmem:[#allocation2 + $0x18] sm:$0xff]
    %v60 = vld [vmem:[#allocation2 + $0x20] sm:$0xff]
    %v61 = vld [vmem:[#allocation2 + $0x28] sm:$0xff]
    %v62 = vld [vmem:[#allocation2 + $0x30] sm:$0xff]
    %v63 = vld [vmem:[#allocation2 + $0x38] sm:$0xff]
    %v64 = vld [vmem:[#allocation2 + $0x40] sm:$0xff]
    %v65 = vld [vmem:[#allocation2 + $0x48] sm:$0xff]
    %v66 = vld [vmem:[#allocation2 + $0x50] sm:$0xff]
    %v67 = vld [vmem:[#allocation2 + $0x58] sm:$0xff]
    %v68 = vld [vmem:[#allocation2 + $0x60] sm:$0xff]
    %v69 = vld [vmem:[#allocation2 + $0x68] sm:$0xff]
    %v70 = vld [vmem:[#allocation2 + $0x70] sm:$0xff]
    %v71 = vld [vmem:[#allocation2 + $0x78] sm:$0xff]
    %v72 = vld [vmem:[#allocation5] sm:$0xff]
    %v73 = vld [vmem:[#allocation5 + $0x8] sm:$0xff]
    %v74 = vld [vmem:[#allocation5 + $0x10] sm:$0xff]
    %v75 = vld [vmem:[#allocation5 + $0x18] sm:$0xff]
    %v76 = vld [vmem:[#allocation5 + $0x20] sm:$0xff]
    %v77 = vld [vmem:[#allocation5 + $0x28] sm:$0xff]
    %v78 = vld [vmem:[#allocation5 + $0x30] sm:$0xff]
    %v79 = vld [vmem:[#allocation5 + $0x38] sm:$0xff]
    %v80 = vld [vmem:[#allocation5 + $0x40] sm:$0xff]
    %v81 = vld [vmem:[#allocation5 + $0x48] sm:$0xff]
    %v82 = vld [vmem:[#allocation5 + $0x50] sm:$0xff]
    %v83 = vld [vmem:[#allocation5 + $0x58] sm:$0xff]
    %v84 = vld [vmem:[#allocation5 + $0x60] sm:$0xff]
    %v85 = vld [vmem:[#allocation5 + $0x68] sm:$0xff]
    %v86 = vld [vmem:[#allocation5 + $0x70] sm:$0xff]
    %v87 = vld [vmem:[#allocation5 + $0x78] sm:$0xff]
    %v88 = vsub.f32 %v56, %v72
    %v89 = vsub.f32 %v57, %v73
    %v90 = vsub.f32 %v58, %v74
    %v91 = vsub.f32 %v59, %v75
    %v92 = vsub.f32 %v60, %v76
    %v93 = vsub.f32 %v61, %v77
    %v94 = vsub.f32 %v62, %v78
    %v95 = vsub.f32 %v63, %v79
    %v96 = vsub.f32 %v64, %v80
    %v97 = vsub.f32 %v65, %v81
    %v98 = vsub.f32 %v66, %v82
    %v99 = vsub.f32 %v67, %v83
    %v100 = vsub.f32 %v68, %v84
    %v101 = vsub.f32 %v69, %v85
    %v102 = vsub.f32 %v70, %v86
    %v103 = vsub.f32 %v71, %v87
    %v104 = vld [vmem:[#allocation7] sm:$0xff]
    %v105 = vld [vmem:[#allocation7 + $0x8] sm:$0xff]
    %v106 = vld [vmem:[#allocation7 + $0x10] sm:$0xff]
    %v107 = vld [vmem:[#allocation7 + $0x18] sm:$0xff]
    %v108 = vunpack.c.0.s8 %v104
    %v109 = vunpack.c.1.s8 %v104
    %v110 = vunpack.c.2.s8 %v104
    %v111 = vunpack.c.3.s8 %v104
    %v112 = vunpack.c.0.s8 %v105
    %v113 = vunpack.c.1.s8 %v105
    %v114 = vunpack.c.2.s8 %v105
    %v115 = vunpack.c.3.s8 %v105
    %v116 = vunpack.c.0.s8 %v106
    %v117 = vunpack.c.1.s8 %v106
    %v118 = vunpack.c.2.s8 %v106
    %v119 = vunpack.c.3.s8 %v106
    %v120 = vunpack.c.0.s8 %v107
    %v121 = vunpack.c.1.s8 %v107
    %v122 = vunpack.c.2.s8 %v107
    %v123 = vunpack.c.3.s8 %v107
    %v124 = vcvt.s32.f32 %v108
    %v125 = vcvt.s32.f32 %v109
    %v126 = vcvt.s32.f32 %v110
    %v127 = vcvt.s32.f32 %v111
    %v128 = vcvt.s32.f32 %v112
    %v129 = vcvt.s32.f32 %v113
    %v130 = vcvt.s32.f32 %v114
    %v131 = vcvt.s32.f32 %v115
    %v132 = vcvt.s32.f32 %v116
    %v133 = vcvt.s32.f32 %v117
    %v134 = vcvt.s32.f32 %v118
    %v135 = vcvt.s32.f32 %v119
    %v136 = vcvt.s32.f32 %v120
    %v137 = vcvt.s32.f32 %v121
    %v138 = vcvt.s32.f32 %v122
    %v139 = vcvt.s32.f32 %v123
    %v140 = vmul.f32 %v88, %v88
    %v141 = vmul.f32 %v89, %v89
    %v142 = vmul.f32 %v90, %v90
    %v143 = vmul.f32 %v91, %v91
    %v144 = vmul.f32 %v92, %v92
    %v145 = vmul.f32 %v93, %v93
    %v146 = vmul.f32 %v94, %v94
    %v147 = vmul.f32 %v95, %v95
    %v148 = vmul.f32 %v96, %v96
    %v149 = vmul.f32 %v97, %v97
    %v150 = vmul.f32 %v98, %v98
    %v151 = vmul.f32 %v99, %v99
    %v152 = vmul.f32 %v100, %v100
    %v153 = vmul.f32 %v101, %v101
    %v154 = vmul.f32 %v102, %v102
    %v155 = vmul.f32 %v103, %v103
    %v156 = vmul.f32 %v140, %v124
    %v157 = vmul.f32 %v141, %v125
    %v158 = vmul.f32 %v142, %v126
    %v159 = vmul.f32 %v143, %v127
    %v160 = vmul.f32 %v144, %v128
    %v161 = vmul.f32 %v145, %v129
    %v162 = vmul.f32 %v146, %v130
    %v163 = vmul.f32 %v147, %v131
    %v164 = vmul.f32 %v148, %v132
    %v165 = vmul.f32 %v149, %v133
    %v166 = vmul.f32 %v150, %v134
    %v167 = vmul.f32 %v151, %v135
    %v168 = vmul.f32 %v152, %v136
    %v169 = vmul.f32 %v153, %v137
    %v170 = vmul.f32 %v154, %v138
    %v171 = vmul.f32 %v155, %v139
    %v172 = vadd.f32 %v156, %v157
    %v173 = vadd.f32 %v172, %v158
    %v174 = vadd.f32 %v173, %v159
    %v175 = vadd.f32 %v174, %v160
    %v176 = vadd.f32 %v175, %v161
    %v177 = vadd.f32 %v176, %v162
    %v178 = vadd.f32 %v177, %v163
    %v179 = vadd.f32 %v178, %v164
    %v180 = vadd.f32 %v179, %v165
    %v181 = vadd.f32 %v180, %v166
    %v182 = vadd.f32 %v181, %v167
    %v183 = vadd.f32 %v182, %v168
    %v184 = vadd.f32 %v183, %v169
    %v185 = vadd.f32 %v184, %v170
    %v186 = vadd.f32 %v185, %v171
    %187 = vadd.xlane.f32.xlu0 %v186
    %v188 = vpop.xlane.xlu0 %187
    %v189 = vrot.slane %v188, 4
    %v190 = vadd.f32 %v188, %v189
    %v191 = vrot.slane %v190, 2
    %v192 = vadd.f32 %v190, %v191
    %v193 = vrot.slane %v192, 1
    %v194 = vadd.f32 %v192, %v193
    %s195 = vtos %v194
    %v196 = vadd.s32 %v108, %v112
    %v197 = vadd.s32 %v109, %v113
    %v198 = vadd.s32 %v110, %v114
    %v199 = vadd.s32 %v111, %v115
    %v200 = vadd.s32 %v196, %v116
    %v201 = vadd.s32 %v197, %v117
    %v202 = vadd.s32 %v198, %v118
    %v203 = vadd.s32 %v199, %v119
    %v204 = vadd.s32 %v200, %v120
    %v205 = vadd.s32 %v201, %v121
    %v206 = vadd.s32 %v202, %v122
    %v207 = vadd.s32 %v203, %v123
    %v208 = vadd.s32 %v204, %v205
    %v209 = vadd.s32 %v206, %v207
    %v210 = vadd.s32 %v208, %v209
    %v211 = vand.u32 %v210, 65535
    %v212 = vshrl.u32 %v210, 16
    %v213 = vcvt.s32.f32 %v211
    %v214 = vcvt.s32.f32 %v212
    %215 = vadd.xlane.f32.xlu0 %v213
    %v216 = vpop.xlane.xlu0 %215
    %217 = vadd.xlane.f32.xlu0 %v214
    %v218 = vpop.xlane.xlu0 %217
    %v219 = vcvt.f32.s32 %v216
    %v220 = vcvt.f32.s32 %v218
    %v221 = vshll.u32 %v220, 16
    %v222 = vadd.s32 %v221, %v219
    %v223 = vrot.slane %v222, 4
    %v224 = vadd.s32 %v222, %v223
    %v225 = vrot.slane %v224, 2
    %v226 = vadd.s32 %v224, %v225
    %v227 = vrot.slane %v226, 1
    %v228 = vadd.s32 %v226, %v227
    %s229 = vtos %v228
    %s230 = scvt.s32.f32 %s229
    %s231 = smax.f32 %s230, 1.0
    %v232 = vstv %s231
    %v233 = vrcp.pop %v232
    %s234 = vtos %v233
    %s235 = smul.f32 %s195, %s234
    %s236 = scalar_lea.smem [#allocation8], 0
    %237 = sst [smem:[%s236]] %s235
    // Predicated region
    $region26: #{tpu_custom_call.1} parent=1 // pred_check
      _
    $region27: #{tpu_custom_call.1} parent=1 // pred_check_branch
      %239 = sbr.rel (0) target = $region29
    $region28: #{tpu_custom_call.1} parent=1 // pred_region
      %s241 = ssub.s32 16, 16
      %242 = vsyncadd [#allocation4], %s241
      %245 = dma.smem_to_hbm [#allocation8], 16, %s3, [#allocation4]
    $region29: #{tpu_custom_call.1} parent=1 // pred_fallthru
      _
    // Predicated region
    $region30: #{tpu_custom_call.1} parent=1 // pred_check
      _
    $region31: #{tpu_custom_call.1} parent=1 // pred_check_branch
      %247 = sbr.rel (0) target = $region33
    $region32: #{tpu_custom_call.1} parent=1 // pred_region
      %248 = dma.done [#allocation4], 16
    $region33: #{tpu_custom_call.1} parent=1 // pred_fallthru
      _
    %249 = sfence
    %250 = vsyncpa [#allocation3], 1
    %251 = vsyncpa [#allocation6], 1
    %252 = vsyncpa [#allocation4], 1

</llo_original>
